<compile_context>
chip_gen: v5e
topology: v5e:2x2
jax: 0.10.0
libtpu: 0.0.40
codegen_flags: <defaults>
</compile_context>

<pallas_src>
import functools

import jax
import jax.numpy as jnp
from jax import lax
from jax.experimental import pallas as pl
from jax.experimental.pallas import tpu as pltpu


def _round_up(x, m):
    return ((x + m - 1) // m) * m


def _decoder_kernel(x_ref, w1_ref, b1_ref, w2_ref, b2_ref, w3_ref, b3_ref,
                    out_ref, *, n_out, d_y):
    """One packed row-tile of the fused Decoder MLP (block-diagonal form).

    x_ref:   (tile, P*D)   bf16  P rows of concat([r, x]) packed per super-row
    wN_ref:  (P*K, P*M)    bf16  block-diagonal layer weight (resident)
    bN_ref:  (1, P*M)      f32   bias tiled P times
    out_ref: (tile, P*C)   f32   packed mu||sigma rows (C = 2*d_y = n_out)
    """
    # Layer 1 (single fused dot on the pre-concatenated input)
    h = jnp.dot(x_ref[...], w1_ref[...],
                preferred_element_type=jnp.float32) + b1_ref[...]
    h = jnp.maximum(h, 0.0).astype(jnp.bfloat16)          # ReLU, bf16 operand

    # Layer 2
    h = jnp.dot(h, w2_ref[...],
                preferred_element_type=jnp.float32) + b2_ref[...]
    h = jnp.maximum(h, 0.0).astype(jnp.bfloat16)          # ReLU, bf16 operand

    # Layer 3 (no activation)
    y = jnp.dot(h, w3_ref[...],
                preferred_element_type=jnp.float32) + b3_ref[...]

    # Within each packed group of n_out lanes, lanes [0, d_y) are mu
    # (identity) and lanes [d_y, n_out) get 0.1 + 0.9*softplus.  Softplus is
    # computed on all lanes (EUP slot is spare) and selected with a lane
    # mask — avoids tiny-lane slicing/concat relayouts.
    lane = lax.broadcasted_iota(jnp.int32, y.shape, dimension=1)
    is_mu = (lane % n_out) < d_y
    # numerically stable softplus: log1p(exp(-|x|)) + max(x, 0)
    sp = jnp.log1p(jnp.exp(-jnp.abs(y))) + jnp.maximum(y, 0.0)
    out_ref[...] = jnp.where(is_mu, y, 0.1 + 0.9 * sp).astype(out_ref.dtype)


def decoder_forward(representation, target_x, params):
    """Pallas Decoder forward.

    representation: [B, T, r_dim]   target_x: [B, T, d_x]
    returns (mu, sigma, sigma_diag) with mu/sigma of shape [B, T, d_y].
    """
    w1, b1, w2, b2, w3, b3 = params
    B, T, r_dim = representation.shape
    d_x = target_x.shape[-1]
    D = r_dim + d_x
    H1 = w1.shape[1]
    H2 = w2.shape[1]
    C = w3.shape[1]              # 2 * d_y
    d_y = C // 2
    N = B * T

    # ---- row-packing factor (block-diagonal MXU densification) -----------
    # v6e/v7x MXU contraction width is 256, v5e (and older) 128.  Pack so
    # P * max(layer input width) ~ one MXU K pass; P=1 is the plain matmul.
    try:
        kind = jax.devices()[0].device_kind.lower()
        mxu_k = 256 if ("v6" in kind or "v7" in kind) else 128
    except Exception:
        mxu_k = 256
    pack = max(1, min(8, mxu_k // max(D, H1, H2)))

    # ---- packed-row tile & grid ------------------------------------------
    rows_needed = -(-N // pack)                       # ceil(N / pack)
    # >= 2 grid steps when there is enough work (v7x megacore), tile a
    # multiple of 8 (sublane), capped at 2048 packed rows (VMEM-safe on all
    # generations even double-buffered).
    tile = min(2048, max(8, _round_up(-(-rows_needed // 2), 8)))
    rows_packed = _round_up(rows_needed, tile)
    n_pad = rows_packed * pack
    grid = (rows_packed // tile,)

    # ---- inputs: concat + pad + bf16 cast + row-pack in ONE fused pass ----
    xin = jnp.concatenate(
        [representation.reshape(N, r_dim).astype(jnp.float32),
         target_x.reshape(N, d_x).astype(jnp.float32)], axis=-1)
    if n_pad != N:
        xin = jnp.pad(xin, ((0, n_pad - N), (0, 0)))
    xin = xin.astype(jnp.bfloat16).reshape(rows_packed, pack * D)

    # ---- block-diagonal resident weights (bf16) + tiled biases (f32) ------
    def block_diag(w):
        wb = w.astype(jnp.bfloat16)
        if pack == 1:
            return wb
        k, m = wb.shape
        eye = jnp.eye(pack, dtype=jnp.bfloat16)
        return (eye[:, None, :, None] * wb[None, :, None, :]).reshape(
            pack * k, pack * m)

    w1b, w2b, w3b = block_diag(w1), block_diag(w2), block_diag(w3)
    b1t = jnp.tile(b1.astype(jnp.float32).reshape(1, H1), (1, pack))
    b2t = jnp.tile(b2.astype(jnp.float32).reshape(1, H2), (1, pack))
    b3t = jnp.tile(b3.astype(jnp.float32).reshape(1, C), (1, pack))

    row_spec = lambda feat: pl.BlockSpec((tile, feat), lambda i: (i, 0))
    resident = lambda arr: pl.BlockSpec(arr.shape, lambda i: (0, 0))

    kernel = functools.partial(_decoder_kernel, n_out=C, d_y=d_y)

    out = pl.pallas_call(
        kernel,
        out_shape=jax.ShapeDtypeStruct((rows_packed, pack * C), jnp.float32),
        grid=grid,
        in_specs=[
            row_spec(pack * D),                       # packed input rows
            resident(w1b), resident(b1t),
            resident(w2b), resident(b2t),
            resident(w3b), resident(b3t),
        ],
        out_specs=row_spec(pack * C),
        compiler_params=pltpu.CompilerParams(
            dimension_semantics=("parallel",),
            vmem_limit_bytes=32 * 1024 * 1024),
    )(xin, w1b, b1t, w2b, b2t, w3b, b3t)

    # Un-pack (free row-major view), drop padding, split mu / sigma.
    out = out.reshape(n_pad, C)[:N]
    mu = out[:, :d_y].reshape(B, T, d_y)
    sigma = out[:, d_y:].reshape(B, T, d_y)
    # diag_embed(sigma) -> scale_tril of the MVN (plain-JAX glue).
    sigma_diag = sigma[..., :, None] * jnp.eye(d_y, dtype=sigma.dtype)
    return mu, sigma, sigma_diag


def init_params(key, input_size, output_sizes):
    """Deterministic init matching BatchMLP(xy_size=input_size, output_sizes)."""
    sizes = [input_size] + list(output_sizes)
    params = []
    for i in range(len(output_sizes)):
        key, kw, kb = jax.random.split(key, 3)
        fan_in = sizes[i]
        bound = 1.0 / jnp.sqrt(fan_in)
        w = jax.random.uniform(kw, (sizes[i], sizes[i + 1]), jnp.float32,
                               -bound, bound)
        b = jax.random.uniform(kb, (1, sizes[i + 1]), jnp.float32, -bound, bound)
        params += [w, b]
    return tuple(params)


if __name__ == "__main__":
    key = jax.random.PRNGKey(0)
    B, T = 2, 8
    r_dim, d_x = 16, 16
    d_y = 2
    input_size = r_dim + d_x                  # 32
    output_sizes = [32, 32, 2 * d_y]          # last layer -> mu || log_sigma

    k1, k2, k3 = jax.random.split(key, 3)
    representation = jax.random.normal(k1, (B, T, r_dim), jnp.float32)
    target_x = jax.random.normal(k2, (B, T, d_x), jnp.float32)
    params = init_params(k3, input_size, output_sizes)

    mu, sigma, sigma_diag = decoder_forward(representation, target_x, params)
    jax.block_until_ready((mu, sigma, sigma_diag))

    # ---- references -------------------------------------------------------
    w1, b1, w2, b2, w3, b3 = params
    xin = jnp.concatenate([representation, target_x], -1).reshape(-1, input_size)

    # (a) bf16-operand reference mirroring the kernel numerics (tight check).
    h = jnp.dot(xin.astype(jnp.bfloat16), w1.astype(jnp.bfloat16),
                preferred_element_type=jnp.float32) + b1
    h = jnp.maximum(h, 0.0).astype(jnp.bfloat16)
    h = jnp.dot(h, w2.astype(jnp.bfloat16),
                preferred_element_type=jnp.float32) + b2
    h = jnp.maximum(h, 0.0).astype(jnp.bfloat16)
    y = jnp.dot(h, w3.astype(jnp.bfloat16),
                preferred_element_type=jnp.float32) + b3
    mu_bf = y[:, :d_y].reshape(B, T, d_y)
    sp = jnp.log1p(jnp.exp(-jnp.abs(y[:, d_y:]))) + jnp.maximum(y[:, d_y:], 0.0)
    sigma_bf = (0.1 + 0.9 * sp).reshape(B, T, d_y)

    # (b) full-precision f32 spec reference (loose check for the bf16 cast).
    hf = jnp.maximum(xin @ w1 + b1, 0.0)
    hf = jnp.maximum(hf @ w2 + b2, 0.0)
    yf = hf @ w3 + b3
    mu_f32 = yf[:, :d_y].reshape(B, T, d_y)
    spf = jnp.log1p(jnp.exp(-jnp.abs(yf[:, d_y:]))) + jnp.maximum(yf[:, d_y:], 0.0)
    sigma_f32 = (0.1 + 0.9 * spf).reshape(B, T, d_y)

    assert mu.shape == (B, T, d_y)
    assert sigma.shape == (B, T, d_y)
    assert sigma_diag.shape == (B, T, d_y, d_y)
    assert bool(jnp.all(sigma >= 0.1)), "sigma must respect the 0.1 floor"
    assert bool(jnp.allclose(mu, mu_bf, atol=2e-3, rtol=2e-3))
    assert bool(jnp.allclose(sigma, sigma_bf, atol=2e-3, rtol=2e-3))
    assert bool(jnp.allclose(mu, mu_f32, atol=5e-2, rtol=5e-2))
    assert bool(jnp.allclose(sigma, sigma_f32, atol=5e-2, rtol=5e-2))
    print("KERNEL_OK")
</pallas_src>

<mosaic_0001>
module attributes {stable_mosaic.version = 11 : i64} {
  func.func @_decoder_kernel(%arg0: i32, %arg1: memref<8x128xbf16, #tpu.memory_space<vmem>>, %arg2: memref<128x128xbf16, #tpu.memory_space<vmem>>, %arg3: memref<1x128xf32, #tpu.memory_space<vmem>>, %arg4: memref<128x128xbf16, #tpu.memory_space<vmem>>, %arg5: memref<1x128xf32, #tpu.memory_space<vmem>>, %arg6: memref<128x16xbf16, #tpu.memory_space<vmem>>, %arg7: memref<1x16xf32, #tpu.memory_space<vmem>>, %arg8: memref<8x16xf32, #tpu.memory_space<vmem>>) attributes {dimension_semantics = [#tpu.dimension_semantics<parallel>], iteration_bounds = array<i64: 1>, scalar_prefetch = 0 : i64, scratch_operands = 0 : i64, tpu.core_type = #tpu.core_type<tc>, window_params = [{transform_indices = @transform_0, window_bounds = array<i64: 8, 128>}, {pipeline_mode = #tpu.pipeline_mode<synchronous>, transform_indices = @transform_1, window_bounds = array<i64: 128, 128>}, {pipeline_mode = #tpu.pipeline_mode<synchronous>, transform_indices = @transform_2, window_bounds = array<i64: 1, 128>}, {pipeline_mode = #tpu.pipeline_mode<synchronous>, transform_indices = @transform_3, window_bounds = array<i64: 128, 128>}, {pipeline_mode = #tpu.pipeline_mode<synchronous>, transform_indices = @transform_4, window_bounds = array<i64: 1, 128>}, {pipeline_mode = #tpu.pipeline_mode<synchronous>, transform_indices = @transform_5, window_bounds = array<i64: 128, 16>}, {pipeline_mode = #tpu.pipeline_mode<synchronous>, transform_indices = @transform_6, window_bounds = array<i64: 1, 16>}, {transform_indices = @transform_7, window_bounds = array<i64: 8, 16>}]} {
    %c0 = arith.constant 0 : index
    %c0_0 = arith.constant 0 : index
    %0 = vector.load %arg1[%c0, %c0_0] : memref<8x128xbf16, #tpu.memory_space<vmem>>, vector<8x128xbf16>
    %c0_1 = arith.constant 0 : index
    %c0_2 = arith.constant 0 : index
    %1 = vector.load %arg2[%c0_1, %c0_2] : memref<128x128xbf16, #tpu.memory_space<vmem>>, vector<128x128xbf16>
    %cst = arith.constant dense<0.000000e+00> : vector<8x128xf32>
    %2 = tpu.matmul %0, %1, %cst {dimension_numbers = #tpu.dot_dimension_numbers<[1], [0], [0], [1], [0, 0, 1, 1], [], []>} : vector<8x128xbf16>, vector<128x128xbf16>, vector<8x128xf32> -> vector<8x128xf32>
    %c0_3 = arith.constant 0 : index
    %c0_4 = arith.constant 0 : index
    %3 = vector.load %arg3[%c0_3, %c0_4] : memref<1x128xf32, #tpu.memory_space<vmem>>, vector<1x128xf32>
    %4 = vector.broadcast %3 : vector<1x128xf32> to vector<8x128xf32>
    %5 = arith.addf %2, %4 : vector<8x128xf32>
    %cst_5 = arith.constant 0.000000e+00 : f32
    %6 = vector.broadcast %cst_5 : f32 to vector<8x128xf32>
    %7 = arith.maximumf %5, %6 : vector<8x128xf32>
    %8 = arith.truncf %7 : vector<8x128xf32> to vector<8x128xbf16>
    %c0_6 = arith.constant 0 : index
    %c0_7 = arith.constant 0 : index
    %9 = vector.load %arg4[%c0_6, %c0_7] : memref<128x128xbf16, #tpu.memory_space<vmem>>, vector<128x128xbf16>
    %cst_8 = arith.constant dense<0.000000e+00> : vector<8x128xf32>
    %10 = tpu.matmul %8, %9, %cst_8 {dimension_numbers = #tpu.dot_dimension_numbers<[1], [0], [0], [1], [0, 0, 1, 1], [], []>} : vector<8x128xbf16>, vector<128x128xbf16>, vector<8x128xf32> -> vector<8x128xf32>
    %c0_9 = arith.constant 0 : index
    %c0_10 = arith.constant 0 : index
    %11 = vector.load %arg5[%c0_9, %c0_10] : memref<1x128xf32, #tpu.memory_space<vmem>>, vector<1x128xf32>
    %12 = vector.broadcast %11 : vector<1x128xf32> to vector<8x128xf32>
    %13 = arith.addf %10, %12 : vector<8x128xf32>
    %cst_11 = arith.constant 0.000000e+00 : f32
    %14 = vector.broadcast %cst_11 : f32 to vector<8x128xf32>
    %15 = arith.maximumf %13, %14 : vector<8x128xf32>
    %16 = arith.truncf %15 : vector<8x128xf32> to vector<8x128xbf16>
    %c0_12 = arith.constant 0 : index
    %c0_13 = arith.constant 0 : index
    %17 = vector.load %arg6[%c0_12, %c0_13] : memref<128x16xbf16, #tpu.memory_space<vmem>>, vector<128x16xbf16>
    %cst_14 = arith.constant dense<0.000000e+00> : vector<8x16xf32>
    %18 = tpu.matmul %16, %17, %cst_14 {dimension_numbers = #tpu.dot_dimension_numbers<[1], [0], [0], [1], [0, 0, 1, 1], [], []>} : vector<8x128xbf16>, vector<128x16xbf16>, vector<8x16xf32> -> vector<8x16xf32>
    %c0_15 = arith.constant 0 : index
    %c0_16 = arith.constant 0 : index
    %19 = vector.load %arg7[%c0_15, %c0_16] : memref<1x16xf32, #tpu.memory_space<vmem>>, vector<1x16xf32>
    %20 = vector.broadcast %19 : vector<1x16xf32> to vector<8x16xf32>
    %21 = arith.addf %18, %20 : vector<8x16xf32>
    %22 = tpu.iota {dimensions = array<i32: 1>} : vector<8x16xi32>
    %c4_i32 = arith.constant 4 : i32
    %c0_i32 = arith.constant 0 : i32
    %23 = arith.cmpi eq, %c4_i32, %c0_i32 : i32
    %c1_i32 = arith.constant 1 : i32
    %24 = arith.select %23, %c1_i32, %c4_i32 : i32
    %25 = vector.broadcast %24 : i32 to vector<8x16xi32>
    %26 = arith.remsi %22, %25 : vector<8x16xi32>
    %c0_i32_17 = arith.constant 0 : i32
    %27 = vector.broadcast %c0_i32_17 : i32 to vector<8x16xi32>
    %28 = arith.cmpi ne, %26, %27 : vector<8x16xi32>
    %c0_i32_18 = arith.constant 0 : i32
    %29 = vector.broadcast %c0_i32_18 : i32 to vector<8x16xi32>
    %30 = arith.cmpi slt, %26, %29 : vector<8x16xi32>
    %c0_i32_19 = arith.constant 0 : i32
    %31 = arith.cmpi slt, %24, %c0_i32_19 : i32
    %32 = vector.broadcast %31 : i1 to vector<8x16xi1>
    %33 = vector.broadcast %32 : vector<8x16xi1> to vector<8x16xi1>
    %34 = arith.xori %30, %33 : vector<8x16xi1>
    %35 = arith.andi %34, %28 : vector<8x16xi1>
    %36 = vector.broadcast %24 : i32 to vector<8x16xi32>
    %37 = arith.addi %26, %36 : vector<8x16xi32>
    %38 = arith.select %35, %37, %26 : vector<8x16xi1>, vector<8x16xi32>
    %c2_i32 = arith.constant 2 : i32
    %39 = vector.broadcast %c2_i32 : i32 to vector<8x16xi32>
    %40 = arith.cmpi slt, %38, %39 : vector<8x16xi32>
    %41 = math.absf %21 : vector<8x16xf32>
    %cst_20 = arith.constant 0.000000e+00 : f32
    %42 = vector.broadcast %cst_20 : f32 to vector<8x16xf32>
    %43 = arith.subf %42, %41 : vector<8x16xf32>
    %44 = math.exp %43 : vector<8x16xf32>
    %45 = math.log1p %44 : vector<8x16xf32>
    %cst_21 = arith.constant 0.000000e+00 : f32
    %46 = vector.broadcast %cst_21 : f32 to vector<8x16xf32>
    %47 = arith.maximumf %21, %46 : vector<8x16xf32>
    %48 = arith.addf %45, %47 : vector<8x16xf32>
    %cst_22 = arith.constant 0.899999976 : f32
    %49 = vector.broadcast %cst_22 : f32 to vector<8x16xf32>
    %50 = arith.mulf %49, %48 : vector<8x16xf32>
    %cst_23 = arith.constant 1.000000e-01 : f32
    %51 = vector.broadcast %cst_23 : f32 to vector<8x16xf32>
    %52 = arith.addf %51, %50 : vector<8x16xf32>
    %53 = arith.select %40, %21, %52 : vector<8x16xi1>, vector<8x16xf32>
    %c0_24 = arith.constant 0 : index
    %c0_25 = arith.constant 0 : index
    %54 = vector.load %arg8[%c0_24, %c0_25] : memref<8x16xf32, #tpu.memory_space<vmem>>, vector<8x16xf32>
    tpu.vector_store %arg8[%c0_24, %c0_25], %53 {strides = array<i32>} : memref<8x16xf32, #tpu.memory_space<vmem>>, vector<8x16xf32>,
    return
  }
  func.func @transform_0(%arg0: i32) -> (i32, i32) {
    %c0_i32 = arith.constant 0 : i32
    %c0_i32_0 = arith.constant 0 : i32
    return %arg0, %c0_i32 : i32, i32
  }
  func.func @transform_1(%arg0: i32) -> (i32, i32) {
    %c0_i32 = arith.constant 0 : i32
    %c0_i32_0 = arith.constant 0 : i32
    %c0_i32_1 = arith.constant 0 : i32
    return %c0_i32, %c0_i32_0 : i32, i32
  }
  func.func @transform_2(%arg0: i32) -> (i32, i32) {
    %c0_i32 = arith.constant 0 : i32
    %c0_i32_0 = arith.constant 0 : i32
    %c0_i32_1 = arith.constant 0 : i32
    return %c0_i32, %c0_i32_0 : i32, i32
  }
  func.func @transform_3(%arg0: i32) -> (i32, i32) {
    %c0_i32 = arith.constant 0 : i32
    %c0_i32_0 = arith.constant 0 : i32
    %c0_i32_1 = arith.constant 0 : i32
    return %c0_i32, %c0_i32_0 : i32, i32
  }
  func.func @transform_4(%arg0: i32) -> (i32, i32) {
    %c0_i32 = arith.constant 0 : i32
    %c0_i32_0 = arith.constant 0 : i32
    %c0_i32_1 = arith.constant 0 : i32
    return %c0_i32, %c0_i32_0 : i32, i32
  }
  func.func @transform_5(%arg0: i32) -> (i32, i32) {
    %c0_i32 = arith.constant 0 : i32
    %c0_i32_0 = arith.constant 0 : i32
    %c0_i32_1 = arith.constant 0 : i32
    return %c0_i32, %c0_i32_0 : i32, i32
  }
  func.func @transform_6(%arg0: i32) -> (i32, i32) {
    %c0_i32 = arith.constant 0 : i32
    %c0_i32_0 = arith.constant 0 : i32
    %c0_i32_1 = arith.constant 0 : i32
    return %c0_i32, %c0_i32_0 : i32, i32
  }
  func.func @transform_7(%arg0: i32) -> (i32, i32) {
    %c0_i32 = arith.constant 0 : i32
    %c0_i32_0 = arith.constant 0 : i32
    return %arg0, %c0_i32 : i32, i32
  }
}

</mosaic_0001>

<llo_original>
// kernel: tpu_custom_call.1
$region0: #{tpu_custom_call.1}
  #allocation0 [shape = 'u32[]', space=smem, size = 0x4, offset = 0x4, fixed_abs, tag = 'smem constant byte address 0x4 - core index']
  #allocation1 [shape = 'u32[72,128]{1,0:T(1,128)}', space=vmem, size = 0x9000, scoped, tag = 'internal scratch']
  %s0 = inlined_call_operand.vmem [shape: bf16[8,128], index: 0, kind: input, shape index: {}]
  %s1 = inlined_call_operand.vmem [shape: bf16[128,128], index: 1, kind: input, shape index: {}]
  %s2 = inlined_call_operand.vmem [shape: f32[1,128], index: 2, kind: input, shape index: {}]
  %s3 = inlined_call_operand.hbm [shape: bf16[128,128], index: 3, kind: input, shape index: {}]
  %s4 = inlined_call_operand.vmem [shape: f32[1,128], index: 4, kind: input, shape index: {}]
  %s5 = inlined_call_operand.vmem [shape: bf16[128,16], index: 5, kind: input, shape index: {}]
  %s6 = inlined_call_operand.vmem [shape: f32[1,16], index: 6, kind: input, shape index: {}]
  %s7 = inlined_call_operand.hbm [shape: f32[8,16], index: 7, kind: output, shape index: {}]
  %s8 = sld [smem:[#allocation0]]
  $region42: #{tpu_custom_call.1} parent=0
    _
  %s10 = ssub.s32 1, %s8
  %s11 = scalar_select 0, %s10, %s8
  $region1: #{tpu_custom_call.1} parent=0
    #allocation2 [shape = 'u8[32768]{0}', space=vmem, size = 0x8000, scoped, tag = 'input window, operand 3, single buffered']
    #allocation3 [shape = 's32[1]{0}', space=sflag, size = 0x4, scoped, tag = 'scoped memory for tpu_custom_call.1']
    #allocation4 [shape = 's32[1]{0}', space=sflag, size = 0x4, scoped, tag = 'scoped memory for tpu_custom_call.1']
    #allocation5 [shape = 'u8[4096]{0}', space=vmem, size = 0x1000, scoped, tag = 'output window, operand 0, single buffered']
    %12 = vsyncpa [#allocation3], 0
    %13 = vsyncpa [#allocation4], 0
    // Predicated region
    $region2: #{tpu_custom_call.1} parent=1 // pred_check
      _
    $region3: #{tpu_custom_call.1} parent=1 // pred_check_branch
      %15 = sbr.rel (0) target = $region5
    $region4: #{tpu_custom_call.1} parent=1 // pred_region
      _
    $region5: #{tpu_custom_call.1} parent=1 // pred_fallthru
      _
    // Predicated region
    $region6: #{tpu_custom_call.1} parent=1 // pred_check
      _
    $region7: #{tpu_custom_call.1} parent=1 // pred_check_branch
      %17 = sbr.rel (0) target = $region9
    $region8: #{tpu_custom_call.1} parent=1 // pred_region
      _
    $region9: #{tpu_custom_call.1} parent=1 // pred_fallthru
      _
    // Predicated region
    $region10: #{tpu_custom_call.1} parent=1 // pred_check
      _
    $region11: #{tpu_custom_call.1} parent=1 // pred_check_branch
      %19 = sbr.rel (0) target = $region13
    $region12: #{tpu_custom_call.1} parent=1 // pred_region
      _
    $region13: #{tpu_custom_call.1} parent=1 // pred_fallthru
      _
    // Predicated region
    $region14: #{tpu_custom_call.1} parent=1 // pred_check
      _
    $region15: #{tpu_custom_call.1} parent=1 // pred_check_branch
      %21 = sbr.rel (0) target = $region17
    $region16: #{tpu_custom_call.1} parent=1 // pred_region
      %23 = vsyncadd [#allocation3], 0
      %s24 = sshll.u32 %s3, 4
      %s25 = int_to_ptr.hbm [resolvable:$true] %s24
      %s26 = sshll.u32 [#allocation2], 4
      %s27 = int_to_ptr.vmem [resolvable:$true] %s26
      %32 = dma.hbm_to_vmem [thread:$0]  %s25, 1024, %s27, [#allocation3], 64, 64, 4
    $region17: #{tpu_custom_call.1} parent=1 // pred_fallthru
      _
    // Predicated region
    $region18: #{tpu_custom_call.1} parent=1 // pred_check
      _
    $region19: #{tpu_custom_call.1} parent=1 // pred_check_branch
      %34 = sbr.rel (0) target = $region21
    $region20: #{tpu_custom_call.1} parent=1 // pred_region
      _
    $region21: #{tpu_custom_call.1} parent=1 // pred_fallthru
      _
    // Predicated region
    $region22: #{tpu_custom_call.1} parent=1 // pred_check
      _
    $region23: #{tpu_custom_call.1} parent=1 // pred_check_branch
      %36 = sbr.rel (0) target = $region25
    $region24: #{tpu_custom_call.1} parent=1 // pred_region
      _
    $region25: #{tpu_custom_call.1} parent=1 // pred_fallthru
      _
    // Predicated region
    $region26: #{tpu_custom_call.1} parent=1 // pred_check
      _
    $region27: #{tpu_custom_call.1} parent=1 // pred_check_branch
      %38 = sbr.rel (0) target = $region29
    $region28: #{tpu_custom_call.1} parent=1 // pred_region
      _
    $region29: #{tpu_custom_call.1} parent=1 // pred_fallthru
      _
    // Predicated region
    $region30: #{tpu_custom_call.1} parent=1 // pred_check
      _
    $region31: #{tpu_custom_call.1} parent=1 // pred_check_branch
      %40 = sbr.rel (0) target = $region33
    $region32: #{tpu_custom_call.1} parent=1 // pred_region
      %42 = dma.done [#allocation3], 1024
    $region33: #{tpu_custom_call.1} parent=1 // pred_fallthru
      _
    %v43 = vld [vmem:[%s0] sm:$0xf]
    %v44 = vld [vmem:[%s1] sm:$0xf]
    %v45 = vld [vmem:[%s1 + $0x4] sm:$0xf]
    %v46 = vld [vmem:[%s1 + $0x8] sm:$0xf]
    %v47 = vld [vmem:[%s1 + $0xc] sm:$0xf]
    %v48 = vld [vmem:[%s1 + $0x10] sm:$0xf]
    %v49 = vld [vmem:[%s1 + $0x14] sm:$0xf]
    %v50 = vld [vmem:[%s1 + $0x18] sm:$0xf]
    %v51 = vld [vmem:[%s1 + $0x1c] sm:$0xf]
    %v52 = vld [vmem:[%s1 + $0x20] sm:$0xf]
    %v53 = vld [vmem:[%s1 + $0x24] sm:$0xf]
    %v54 = vld [vmem:[%s1 + $0x28] sm:$0xf]
    %v55 = vld [vmem:[%s1 + $0x2c] sm:$0xf]
    %v56 = vld [vmem:[%s1 + $0x30] sm:$0xf]
    %v57 = vld [vmem:[%s1 + $0x34] sm:$0xf]
    %v58 = vld [vmem:[%s1 + $0x38] sm:$0xf]
    %v59 = vld [vmem:[%s1 + $0x3c] sm:$0xf]
    %v60 = vld [vmem:[%s2] sm:$0x1]
    %v62 = vperm.slane %v60, 0
    %v80 = vunpack.c.l.b16 %v44
    %v81 = vunpack.c.l.b16 %v45
    %v82 = vunpack.c.l.b16 %v46
    %v83 = vunpack.c.l.b16 %v47
    %v84 = vunpack.c.l.b16 %v48
    %v85 = vunpack.c.l.b16 %v49
    %v86 = vunpack.c.l.b16 %v50
    %v87 = vunpack.c.l.b16 %v51
    %v88 = vunpack.c.l.b16 %v52
    %v89 = vunpack.c.l.b16 %v53
    %v90 = vunpack.c.l.b16 %v54
    %v91 = vunpack.c.l.b16 %v55
    %v92 = vunpack.c.l.b16 %v56
    %v93 = vunpack.c.l.b16 %v57
    %v94 = vunpack.c.l.b16 %v58
    %v95 = vunpack.c.l.b16 %v59
    %v96 = vpack.c.b16 %v81, %v80
    %v97 = vpack.c.b16 %v83, %v82
    %v98 = vpack.c.b16 %v85, %v84
    %v99 = vpack.c.b16 %v87, %v86
    %v100 = vpack.c.b16 %v89, %v88
    %v101 = vpack.c.b16 %v91, %v90
    %v102 = vpack.c.b16 %v93, %v92
    %v103 = vpack.c.b16 %v95, %v94
    %112 = vmatpush.bf16.msra.mxu0 %v103
    %113 = vmatpush.bf16.msra.mxu0 %v102
    %114 = vmatpush.bf16.msra.mxu0 %v101
    %115 = vmatpush.bf16.msra.mxu0 %v100
    %116 = vmatpush.bf16.msra.mxu0 %v99
    %117 = vmatpush.bf16.msra.mxu0 %v98
    %118 = vmatpush.bf16.msra.mxu0 %v97
    %119 = vmatpush.bf16.msra.mxu0 %v96
    %120 = vmatmul.bf16.gmra.mxu0 %v43
    %v121 = vpop.f32.mrf.mxu0
    %v122 = vadd.f32 %v62, %v121
    %v123 = vpop.f32.mrf.mxu0
    %124 = vdwg.mxu0
    %v125 = vmax.f32 %v122, 0.0
    %v126 = vpack.c.bf16 %v125, %v125
    %v127 = vld [vmem:[#allocation2] sm:$0xf]
    %v128 = vld [vmem:[#allocation2 + $0x4] sm:$0xf]
    %v129 = vld [vmem:[#allocation2 + $0x8] sm:$0xf]
    %v130 = vld [vmem:[#allocation2 + $0xc] sm:$0xf]
    %v131 = vld [vmem:[#allocation2 + $0x10] sm:$0xf]
    %v132 = vld [vmem:[#allocation2 + $0x14] sm:$0xf]
    %v133 = vld [vmem:[#allocation2 + $0x18] sm:$0xf]
    %v134 = vld [vmem:[#allocation2 + $0x1c] sm:$0xf]
    %v135 = vld [vmem:[#allocation2 + $0x20] sm:$0xf]
    %v136 = vld [vmem:[#allocation2 + $0x24] sm:$0xf]
    %v137 = vld [vmem:[#allocation2 + $0x28] sm:$0xf]
    %v138 = vld [vmem:[#allocation2 + $0x2c] sm:$0xf]
    %v139 = vld [vmem:[#allocation2 + $0x30] sm:$0xf]
    %v140 = vld [vmem:[#allocation2 + $0x34] sm:$0xf]
    %v141 = vld [vmem:[#allocation2 + $0x38] sm:$0xf]
    %v142 = vld [vmem:[#allocation2 + $0x3c] sm:$0xf]
    %v143 = vld [vmem:[%s4] sm:$0x1]
    %v145 = vperm.slane %v143, 0
    %v163 = vunpack.c.l.b16 %v127
    %v164 = vunpack.c.l.b16 %v128
    %v165 = vunpack.c.l.b16 %v129
    %v166 = vunpack.c.l.b16 %v130
    %v167 = vunpack.c.l.b16 %v131
    %v168 = vunpack.c.l.b16 %v132
    %v169 = vunpack.c.l.b16 %v133
    %v170 = vunpack.c.l.b16 %v134
    %v171 = vunpack.c.l.b16 %v135
    %v172 = vunpack.c.l.b16 %v136
    %v173 = vunpack.c.l.b16 %v137
    %v174 = vunpack.c.l.b16 %v138
    %v175 = vunpack.c.l.b16 %v139
    %v176 = vunpack.c.l.b16 %v140
    %v177 = vunpack.c.l.b16 %v141
    %v178 = vunpack.c.l.b16 %v142
    %v179 = vpack.c.b16 %v164, %v163
    %v180 = vpack.c.b16 %v166, %v165
    %v181 = vpack.c.b16 %v168, %v167
    %v182 = vpack.c.b16 %v170, %v169
    %v183 = vpack.c.b16 %v172, %v171
    %v184 = vpack.c.b16 %v174, %v173
    %v185 = vpack.c.b16 %v176, %v175
    %v186 = vpack.c.b16 %v178, %v177
    %195 = vmatpush.bf16.msra.mxu0 %v186
    %196 = vmatpush.bf16.msra.mxu0 %v185
    %197 = vmatpush.bf16.msra.mxu0 %v184
    %198 = vmatpush.bf16.msra.mxu0 %v183
    %199 = vmatpush.bf16.msra.mxu0 %v182
    %200 = vmatpush.bf16.msra.mxu0 %v181
    %201 = vmatpush.bf16.msra.mxu0 %v180
    %202 = vmatpush.bf16.msra.mxu0 %v179
    %203 = vmatmul.bf16.gmra.mxu0 %v126
    %v204 = vpop.f32.mrf.mxu0
    %v205 = vadd.f32 %v145, %v204
    %v206 = vpop.f32.mrf.mxu0
    %207 = vdwg.mxu0
    %v208 = vmax.f32 %v205, 0.0
    %v209 = vpack.c.bf16 %v208, %v208
    %v210 = vld [vmem:[%s5] sm:$0xf]
    %v211 = vld [vmem:[%s5 + $0x4] sm:$0xf]
    %v212 = vld [vmem:[%s5 + $0x8] sm:$0xf]
    %v213 = vld [vmem:[%s5 + $0xc] sm:$0xf]
    %v214 = vld [vmem:[%s5 + $0x10] sm:$0xf]
    %v215 = vld [vmem:[%s5 + $0x14] sm:$0xf]
    %v216 = vld [vmem:[%s5 + $0x18] sm:$0xf]
    %v217 = vld [vmem:[%s5 + $0x1c] sm:$0xf]
    %v218 = vld [vmem:[%s5 + $0x20] sm:$0xf]
    %v219 = vld [vmem:[%s5 + $0x24] sm:$0xf]
    %v220 = vld [vmem:[%s5 + $0x28] sm:$0xf]
    %v221 = vld [vmem:[%s5 + $0x2c] sm:$0xf]
    %v222 = vld [vmem:[%s5 + $0x30] sm:$0xf]
    %v223 = vld [vmem:[%s5 + $0x34] sm:$0xf]
    %v224 = vld [vmem:[%s5 + $0x38] sm:$0xf]
    %v225 = vld [vmem:[%s5 + $0x3c] sm:$0xf]
    %v226 = vld [vmem:[%s6] sm:$0x1]
    %v228 = vperm.slane %v226, 0
    %v246 = vunpack.c.l.b16 %v210
    %v247 = vunpack.c.l.b16 %v211
    %v248 = vunpack.c.l.b16 %v212
    %v249 = vunpack.c.l.b16 %v213
    %v250 = vunpack.c.l.b16 %v214
    %v251 = vunpack.c.l.b16 %v215
    %v252 = vunpack.c.l.b16 %v216
    %v253 = vunpack.c.l.b16 %v217
    %v254 = vunpack.c.l.b16 %v218
    %v255 = vunpack.c.l.b16 %v219
    %v256 = vunpack.c.l.b16 %v220
    %v257 = vunpack.c.l.b16 %v221
    %v258 = vunpack.c.l.b16 %v222
    %v259 = vunpack.c.l.b16 %v223
    %v260 = vunpack.c.l.b16 %v224
    %v261 = vunpack.c.l.b16 %v225
    %v262 = vpack.c.b16 %v247, %v246
    %v263 = vpack.c.b16 %v249, %v248
    %v264 = vpack.c.b16 %v251, %v250
    %v265 = vpack.c.b16 %v253, %v252
    %v266 = vpack.c.b16 %v255, %v254
    %v267 = vpack.c.b16 %v257, %v256
    %v268 = vpack.c.b16 %v259, %v258
    %v269 = vpack.c.b16 %v261, %v260
    %278 = vmatpush.bf16.msra.mxu0 %v269
    %279 = vmatpush.bf16.msra.mxu0 %v268
    %280 = vmatpush.bf16.msra.mxu0 %v267
    %281 = vmatpush.bf16.msra.mxu0 %v266
    %282 = vmatpush.bf16.msra.mxu0 %v265
    %283 = vmatpush.bf16.msra.mxu0 %v264
    %284 = vmatpush.bf16.msra.mxu0 %v263
    %285 = vmatpush.bf16.msra.mxu0 %v262
    %286 = vmatmul.bf16.gmra.mxu0 %v209
    %v287 = vpop.f32.mrf.mxu0
    %v288 = vadd.f32 %v228, %v287
    %v289 = vpop.f32.mrf.mxu0
    %290 = vdwg.mxu0
    %v291 = vlaneseq
    %v292 = vand.u32 %v291, 127
    %vm293 = vcmp.lt.s32.totalorder %v292, 0
    %v294 = vsub.s32 0, %v292
    %v295 = vsel %vm293, %v294, %v292
    %v296 = vshrl.u32 %v295, 2
    %v297 = vand.u32 %v295, 3
    %v298 = vsub.s32 0, %v297
    %v299 = vsel %vm293, %v298, %v297
    %vm300 = vcmp.ne.s32.totalorder %v299, 0
    %vm301 = vcmp.lt.s32.totalorder %v299, 0
    %vm302 = vmand %vm301, %vm300
    %v303 = vadd.s32 %v299, 4
    %v304 = vsel %vm302, %v303, %v299
    %vm305 = vcmp.lt.s32.totalorder %v304, 2
    %v306 = vand.u32 2147483647, %v288
    %v307 = vsub.f32 0.0, %v306
    %v308 = vmul.f32 %v307, 1.442695
    %v309 = vpow.pop %v308
    %v310 = vadd.f32 %v309, 1.0
    %v311 = vlog2.pop %v310
    %v312 = vmul.f32 %v311, 0.6931472
    %v313 = vmul.f32 -0.5, %v309
    %v314 = vadd.f32 %v313, 1.0
    %v315 = vmul.f32 %v314, %v309
    %v316 = vand.u32 2147483647, %v309
    %vm317 = vcmp.lt.f32.partialorder %v316, 0.0004427343
    %v318 = vsel %vm317, %v315, %v312
    %v319 = vmax.f32 %v288, 0.0
    %v320 = vadd.f32 %v318, %v319
    %v321 = vmul.f32 %v320, 0.9
    %v322 = vadd.f32 %v321, 0.1
    %v323 = vsel %vm305, %v288, %v322
    %vm324 = vcmask 130048
    %325 = vst.msk [vmem:[#allocation5] sm:$0xff] %vm324, %v323
    // Predicated region
    $region34: #{tpu_custom_call.1} parent=1 // pred_check
      _
    $region35: #{tpu_custom_call.1} parent=1 // pred_check_branch
      %327 = sbr.rel (0) target = $region37
    $region36: #{tpu_custom_call.1} parent=1 // pred_region
      %329 = vsyncadd [#allocation4], 0
      %s331 = sshll.u32 [#allocation5], 4
      %s332 = int_to_ptr.vmem [resolvable:$true] %s331
      %s333 = sshll.u32 %s7, 4
      %s334 = int_to_ptr.hbm [resolvable:$true] %s333
      %336 = dma.vmem_to_hbm [thread:$0]  %s332, 128, %s334, [#allocation4]
    $region37: #{tpu_custom_call.1} parent=1 // pred_fallthru
      _
    // Predicated region
    $region38: #{tpu_custom_call.1} parent=1 // pred_check
      _
    $region39: #{tpu_custom_call.1} parent=1 // pred_check_branch
      %338 = sbr.rel (0) target = $region41
    $region40: #{tpu_custom_call.1} parent=1 // pred_region
      %340 = dma.done [#allocation4], 128
    $region41: #{tpu_custom_call.1} parent=1 // pred_fallthru
      _
    %341 = vsyncpa [#allocation3], 1
    %342 = vsyncpa [#allocation4], 1

</llo_original>
